<compile_context>
chip_gen: v7x
topology: tpu7x:2x2x1
jax: 0.10.0
libtpu: 0.0.40
codegen_flags: <defaults>
</compile_context>

<pallas_src>
import numpy as np
import jax
import jax.numpy as jnp
from jax import lax
from jax.experimental import pallas as pl
from jax.experimental.pallas import tpu as pltpu

MAX_DEGREE = 4
EMB_DIM = 32            # emb_dim
WIDTH_HEAD = 16         # width_head used everywhere in Encoder
ATOM_DIMS = [7, 5, 3]   # synthetic AtomEncoder vocab sizes
BOND_DIMS = [5, 3]      # synthetic BondEncoder vocab sizes
GN_EPS = 1e-5

NARROW_ROW_TILE = 2048          # kernels whose streams are <= 192 lanes wide
WIDE_ROW_TILE = 512             # attention kernels carrying 1024-lane kv / s_node streams
VMEM_LIMIT = 48 * 1024 * 1024   # explicit scoped-VMEM limit (fits v7x 64 MiB physical)


# ---------------------------------------------------------------------------
# shared in-kernel helpers
# ---------------------------------------------------------------------------
def _gn(x, gm2, gs2):
    """GroupNorm(affine=False) on (rows, W) with one fused f32 stats matmul chain.

    gm2 = blockdiag(gm, gm): (2W, 2G); gs2 = blockdiag(gs, gs): (2G, 2W).
    stats = concat([x, x*x], 1) @ gm2 @ gs2 -> [mean | E[x^2]] broadcast per channel.
    Kept in f32 to avoid E[x^2] - mean^2 cancellation issues.
    """
    w = x.shape[1]
    xcat = jnp.concatenate([x, x * x], axis=1)
    stats = jnp.dot(jnp.dot(xcat, gm2, preferred_element_type=jnp.float32), gs2,
                    preferred_element_type=jnp.float32)
    mean, ex2 = stats[:, :w], stats[:, w:]
    var = jnp.maximum(ex2 - mean * mean, 0.0)
    return (x - mean) * lax.rsqrt(var + GN_EPS)


def _bdot(a, w_bf16):
    """bf16 MXU matmul with f32 accumulation."""
    return jnp.dot(a.astype(jnp.bfloat16), w_bf16, preferred_element_type=jnp.float32)


# ---------------------------------------------------------------------------
# Pallas kernels (all row-tiled over the first axis with a 1-D "parallel" grid)
# ---------------------------------------------------------------------------
def fma_kernel(a_ref, b_ref, c_ref, out_ref):
    # lane-dense elementwise a*b + c (h_init and degree-scale accumulate)
    out_ref[...] = a_ref[...] * b_ref[...] + c_ref[...]


def node_pre_kernel(x_ref, w_ref, out_ref):
    # ConvMessage pre-Linear hoisted to node rows (O(N) instead of O(E))
    out_ref[...] = _bdot(x_ref[...], w_ref[...])


def conv_edge_kernel(xd_ref, xs_ref, bond_ref, gm2_ref, gs2_ref,
                     wgv_ref, wpost_ref, bpost_ref, msg_ref):
    # GatedLinearBlock2 on (x_i = pre(x)[dst] + bond, x_j = pre(x)[src] + bond).
    # The two GroupNorms are fused into one 64-wide GN (groups never cross the xi|xj
    # boundary) and gate|value grouped convs are one block-diagonal (64, 2*WS) matmul.
    bond = bond_ref[...]
    x2 = jnp.concatenate([xd_ref[...] + bond, xs_ref[...] + bond], axis=1)
    xn2 = _gn(x2, gm2_ref[...], gs2_ref[...])
    gv = _bdot(xn2, wgv_ref[...])
    ws = gv.shape[1] // 2
    y = jnp.maximum(gv[:, :ws], 0.0) * gv[:, ws:]
    msg_ref[...] = _bdot(y, wpost_ref[...]) + bpost_ref[...]


def glb_kernel(x_ref, wpre_ref, bpre_ref, gm2_ref, gs2_ref, wgv_ref,
               wpost_ref, bpost_ref, out_ref):
    # GatedLinearBlock (ScaleLayer folded into wpost/bpost): pre conv+GN -> gate|val -> post.
    xx = _bdot(x_ref[...], wpre_ref[...]) + bpre_ref[...]
    xn = _gn(xx, gm2_ref[...], gs2_ref[...])
    gv = _bdot(xn, wgv_ref[...])                       # (rows, 2*WS) fused gate|value
    ws = gv.shape[1] // 2
    y = jnp.maximum(gv[:, :ws], 0.0) * gv[:, ws:]
    out_ref[...] = _bdot(y, wpost_ref[...]) + bpost_ref[...]


def att_qkv_kernel(x_ref, wpre_ref, bpre_ref, gm2_ref, gs2_ref, wqkv_ref,
                   eh_ref, ev_ref, qk_ref, kv_ref):
    # AttMessage first half: pre conv + GN, fused q|k|v grouped conv, per-node k (x) v
    # outer product flattened to (rows, n_heads*H*H) via 0/1 expansion matmuls.
    xx = _bdot(x_ref[...], wpre_ref[...]) + bpre_ref[...]
    xn = _gn(xx, gm2_ref[...], gs2_ref[...])
    qkv = _bdot(xn, wqkv_ref[...])                     # (rows, 3*2W)
    hw = qkv.shape[1] // 3
    inv = 1.0 / float(np.sqrt(WIDTH_HEAD))
    # NOTE: unstabilized exp matches the PyTorch reference (pt.exp(msgq(x)/sqrt(H))).
    q = jnp.exp(qkv[:, :hw] * inv)
    k = jnp.exp(qkv[:, hw:2 * hw] * inv)
    v = qkv[:, 2 * hw:]
    qk_ref[...] = jnp.concatenate([q, k], axis=1)      # lane-dense (rows, 128) single store
    kexp = _bdot(k, eh_ref[...])
    vexp = _bdot(v, ev_ref[...])
    kv_ref[...] = (kexp * vexp).astype(jnp.bfloat16)   # einsum('bnh,bnv->bnhv') flattened


def layer_out_kernel(h_ref, conv_ref, virt_ref, q_ref, kg_ref, s_ref,
                     hblk_ref, eh_ref, ered_ref, wpost_a_ref, bpost_a_ref,
                     wpre_ref, bpre_ref, gm2_ref, gs2_ref, wgv_ref,
                     wpost_ref, bpost_ref, out_ref):
    # Fused: AttMessage second half + (h_in + conv + virt + att) + main GatedLinearBlock.
    q = q_ref[...]
    denom = _bdot(q * kg_ref[...], hblk_ref[...])      # per-head sum broadcast (bf16 MXU)
    qn = q * pl.reciprocal(denom, approx=True)
    qexp = _bdot(qn, eh_ref[...]).astype(jnp.bfloat16)
    onv = jnp.dot(qexp * s_ref[...], ered_ref[...],    # einsum('bnh,bnhv->bnv') flattened
                  preferred_element_type=jnp.float32)
    att = _bdot(onv, wpost_a_ref[...]) + bpost_a_ref[...]   # ScaleLayer folded into post
    h = h_ref[...] + conv_ref[...] + virt_ref[...] + att
    # main GatedLinearBlock
    xx = _bdot(h, wpre_ref[...]) + bpre_ref[...]
    xn = _gn(xx, gm2_ref[...], gs2_ref[...])
    gv = _bdot(xn, wgv_ref[...])
    ws = gv.shape[1] // 2
    y = jnp.maximum(gv[:, :ws], 0.0) * gv[:, ws:]
    out_ref[...] = _bdot(y, wpost_ref[...]) + bpost_ref[...]


# ---------------------------------------------------------------------------
# generic row-tiled pallas_call wrappers
# ---------------------------------------------------------------------------
def _round_up(x, m):
    return ((x + m - 1) // m) * m


def _pad_rows(n):
    n = max(int(n), 8)
    if n <= 128:
        return _round_up(n, 8)
    return _round_up(n, 128)


def _choose_tile(n, max_tile):
    """Largest row tile (multiple of 8) that divides n, <= max_tile, preferring >= 2
    grid steps so both v7x TensorCores get work from the 'parallel' grid axis."""
    if n <= 8:
        return n
    cap = min(max_tile, max(n // 2, 8))
    cap -= cap % 8
    cap = max(cap, 8)
    tile = cap
    while n % tile != 0:
        tile -= 8
    return tile


def _cparams():
    return pltpu.CompilerParams(dimension_semantics=("parallel",),
                                vmem_limit_bytes=VMEM_LIMIT)


def run_rowwise(kernel, row_inputs, bcast_inputs, outs, *, max_tile):
    """Run `kernel` over rows of the (pre-padded) 2-D row_inputs. outs: [(width, dtype)]."""
    n = row_inputs[0].shape[0]
    tile = _choose_tile(n, max_tile)
    grid = (n // tile,)
    in_specs = ([pl.BlockSpec((tile, a.shape[1]), lambda i: (i, 0)) for a in row_inputs]
                + [pl.BlockSpec(a.shape, lambda i: (0, 0)) for a in bcast_inputs])
    out_shape = [jax.ShapeDtypeStruct((n, w), dt) for w, dt in outs]
    out_specs = [pl.BlockSpec((tile, w), lambda i: (i, 0)) for w, _ in outs]
    single = len(outs) == 1
    return pl.pallas_call(
        kernel,
        out_shape=out_shape[0] if single else tuple(out_shape),
        grid=grid,
        in_specs=in_specs,
        out_specs=out_specs[0] if single else tuple(out_specs),
        compiler_params=_cparams(),
    )(*row_inputs, *bcast_inputs)


def run_fma(a, b, c):
    """Lane-dense elementwise a*b + c on equally shaped f32 arrays (reshape to 128 lanes)."""
    shape, n = a.shape, a.size
    n_pad = _round_up(n, 8 * 128)
    rows = n_pad // 128

    def prep(x):
        return jnp.pad(x.reshape(-1), (0, n_pad - n)).reshape(rows, 128)

    tile = _choose_tile(rows, NARROW_ROW_TILE)
    out = pl.pallas_call(
        fma_kernel,
        out_shape=jax.ShapeDtypeStruct((rows, 128), jnp.float32),
        grid=(rows // tile,),
        in_specs=[pl.BlockSpec((tile, 128), lambda i: (i, 0))] * 3,
        out_specs=pl.BlockSpec((tile, 128), lambda i: (i, 0)),
        compiler_params=_cparams(),
    )(prep(a), prep(b), prep(c))
    return out.reshape(-1)[:n].reshape(shape)


# ---------------------------------------------------------------------------
# deterministic parameter construction
# ---------------------------------------------------------------------------
def _normal(key, shape, scale=0.1):
    return (scale * jax.random.normal(key, shape)).astype(jnp.float32)


def grouped_dense(key, in_ch, out_ch, groups, scale=0.1):
    """Grouped 1x1 Conv1d(bias=False) as a dense block-diagonal (in_ch, out_ch) matrix."""
    ipg, opg = in_ch // groups, out_ch // groups
    w = np.asarray(scale * jax.random.normal(key, (groups, opg, ipg), jnp.float32))
    dense = np.zeros((in_ch, out_ch), np.float32)
    for g in range(groups):
        dense[g * ipg:(g + 1) * ipg, g * opg:(g + 1) * opg] = w[g].T
    return jnp.asarray(dense)


def gn_mats2(width, groups):
    """Fused GroupNorm stats matrices (mean & E[x^2] in one matmul chain)."""
    cpg = width // groups
    gs = np.kron(np.eye(groups), np.ones((1, cpg))).astype(np.float32)   # (G, W)
    gm = (gs / cpg).T                                                    # (W, G)
    z_m, z_s = np.zeros_like(gm), np.zeros_like(gs)
    gm2 = np.block([[gm, z_m], [z_m, gm]])                               # (2W, 2G)
    gs2 = np.block([[gs, z_s], [z_s, gs]])                               # (2G, 2W)
    return jnp.asarray(gm2), jnp.asarray(gs2)


def att_mats(width):
    H = WIDTH_HEAD
    n_heads = (2 * width) // H
    NHV = n_heads * H * H
    eh = np.zeros((n_heads * H, NHV), np.float32)
    ev = np.zeros((n_heads * H, NHV), np.float32)
    for n in range(n_heads):
        for h in range(H):
            for v in range(H):
                col = n * H * H + h * H + v
                eh[n * H + h, col] = 1.0
                ev[n * H + v, col] = 1.0
    hblk = np.kron(np.eye(n_heads), np.ones((H, H))).astype(np.float32)  # (2W, 2W)
    return (jnp.asarray(eh).astype(jnp.bfloat16),
            jnp.asarray(ev).astype(jnp.bfloat16),
            jnp.asarray(ev.T).astype(jnp.bfloat16),
            jnp.asarray(hblk).astype(jnp.bfloat16))


def init_glb(key, width, num_head, scale_act, post_scale=1.0):
    ks = jax.random.split(key, 6)
    gm2, gs2 = gn_mats2(width, num_head)
    wgate = grouped_dense(ks[2], width, width * scale_act, num_head)
    wval = grouped_dense(ks[3], width, width * scale_act, num_head)
    return dict(
        wpre=_normal(ks[0], (width, width)).astype(jnp.bfloat16),
        bpre=_normal(ks[1], (1, width)),
        gm2=gm2, gs2=gs2,
        wgv=jnp.concatenate([wgate, wval], axis=1).astype(jnp.bfloat16),
        # ScaleLayer (if any) folded into post weights / bias
        wpost=(_normal(ks[4], (width * scale_act, width)) * post_scale).astype(jnp.bfloat16),
        bpost=_normal(ks[5], (1, width)) * post_scale,
    )


def init_params(key, num_layers, conv_hop, conv_kernel):
    W = EMB_DIM
    keys = iter(jax.random.split(key, 4096))
    nk = lambda: next(keys)
    params = {}
    params['atom_tables'] = [_normal(nk(), (d, W)) for d in ATOM_DIMS]
    params['bond_tables'] = [_normal(nk(), (d, W)) for d in BOND_DIMS]
    params['scale_enc'] = jnp.exp(
        np.log(0.1) + 0.02 * jax.random.normal(nk(), (MAX_DEGREE, W))).astype(jnp.float32)
    eh, ev, ered, hblk = att_mats(W)
    gm2_conv, gs2_conv = gn_mats2(2 * W, 2 * 16)   # fused GN over [x_i | x_j], 16 groups each

    layers = []
    for _ in range(num_layers):
        lp = {}
        convs = []
        for _ in range(conv_hop * conv_kernel):
            wgate = np.asarray(grouped_dense(nk(), W, W, 16))   # width_scale = 1
            wval = np.asarray(grouped_dense(nk(), W, W, 16))
            zero = np.zeros((W, W), np.float32)
            wgv = np.block([[wgate, zero], [zero, wval]])       # (64, 64): gate(x_i)|val(x_j)
            convs.append(dict(
                bond_tables=[_normal(nk(), (d, W)) for d in BOND_DIMS],
                wlin=_normal(nk(), (W, W)).astype(jnp.bfloat16),
                gm2=gm2_conv, gs2=gs2_conv,
                wgv=jnp.asarray(wgv).astype(jnp.bfloat16),
                wpost=_normal(nk(), (W, W)).astype(jnp.bfloat16),
                bpost=_normal(nk(), (1, W)),
                scale_deg=jnp.exp(np.log(0.1) + 0.02 * jax.random.normal(
                    nk(), (MAX_DEGREE, W))).astype(jnp.float32),
            ))
        lp['conv'] = convs
        lp['virt'] = init_glb(nk(), W, 16, 2, post_scale=0.01)  # ScaleLayer(0.01) folded
        num_grp = W // WIDTH_HEAD
        gm2_att, gs2_att = gn_mats2(W, num_grp)
        wq = grouped_dense(nk(), W, 2 * W, num_grp)
        wk = grouped_dense(nk(), W, 2 * W, num_grp)
        wv = grouped_dense(nk(), W, 2 * W, num_grp)
        lp['att'] = dict(
            wpre=_normal(nk(), (W, W)).astype(jnp.bfloat16), bpre=_normal(nk(), (1, W)),
            gm2=gm2_att, gs2=gs2_att,
            wqkv=jnp.concatenate([wq, wk, wv], axis=1).astype(jnp.bfloat16),   # (W, 3*2W)
            eh=eh, ev=ev, ered=ered, hblk=hblk,
            wpost=(_normal(nk(), (2 * W, W)) * 0.01).astype(jnp.bfloat16),     # scale folded
            bpost=_normal(nk(), (1, W)) * 0.01,
        )
        lp['main'] = init_glb(nk(), W, 16, 3)
        layers.append(lp)
    params['layers'] = layers
    return params


# ---------------------------------------------------------------------------
# Encoder forward (index-based gather/scatter glue around the Pallas kernels)
# ---------------------------------------------------------------------------
def encoder_forward(params, x_atom, edge_index, edge_attr, batch, num_graphs,
                    num_layers, conv_hop, conv_kernel):
    W = EMB_DIM
    N = x_atom.shape[0]
    E = edge_index.shape[1]
    N_pad = _pad_rows(N)
    E_pad = _pad_rows(E)
    B_pad = _pad_rows(num_graphs + 1)            # +1 dummy graph slot for padded nodes
    src, dst = edge_index[0], edge_index[1]

    # node degree (from destination index), clamped like the reference
    deg = jnp.zeros((N,), jnp.float32).at[dst].add(1.0)
    deg_idx = jnp.clip(deg.astype(jnp.int32) - 1, 0, MAX_DEGREE - 1)
    deg_idx = jnp.pad(deg_idx, (0, N_pad - N))

    # embeddings (integer gathers - glue)
    atom_emb = sum(params['atom_tables'][f][x_atom[:, f]] for f in range(len(ATOM_DIMS)))
    atom_emb = jnp.pad(atom_emb, ((0, N_pad - N), (0, 0)))

    def bond_embed(tables):
        be = sum(tables[f][edge_attr[:, f]] for f in range(len(BOND_DIMS)))
        return jnp.pad(be, ((0, E_pad - E), (0, 0)))

    # index plumbing (padded edges scatter out-of-bounds -> dropped; padded nodes live in a
    # dummy graph so they never mix with real rows)
    src_g = jnp.pad(src, (0, E_pad - E))
    dst_g = jnp.pad(dst, (0, E_pad - E))
    dst_s = jnp.pad(dst, (0, E_pad - E), constant_values=N_pad)
    batch_p = jnp.pad(batch, (0, N_pad - N), constant_values=num_graphs)

    def edge_scatter(msgs):
        return jnp.zeros((N_pad, W), jnp.float32).at[dst_s].add(msgs, mode='drop')

    def graph_scatter(x):
        return jnp.zeros((B_pad, x.shape[1]), jnp.float32).at[batch_p].add(x)

    # initial node features: h_in = exp(scale)[deg] * scatter(bond_emb, dst) + atom_emb
    bond0 = bond_embed(params['bond_tables'])
    aggr0 = edge_scatter(bond0)
    degscale0 = params['scale_enc'][deg_idx]
    h_in = run_fma(aggr0, degscale0, atom_emb)

    n_heads = (2 * W) // WIDTH_HEAD
    NHV = n_heads * WIDTH_HEAD * WIDTH_HEAD
    h_att = jnp.zeros((B_pad, NHV), jnp.float32)
    h_virt = jnp.zeros((B_pad, W), jnp.float32)

    for layer in range(num_layers):
        lp = params['layers'][layer]

        # --- ConvMessage --------------------------------------------------
        x_out = jnp.zeros((N_pad, W), jnp.float32)
        x_raw = h_in
        for l in range(conv_hop * conv_kernel):
            # matches the reference hop reset: with hop=1 it fires every iteration after l=0
            if l > 0 and l % conv_hop == 0:
                x_raw = h_in + x_out
                x_out = jnp.zeros((N_pad, W), jnp.float32)
            cp = lp['conv'][l]
            xpre = run_rowwise(node_pre_kernel, [x_raw], [cp['wlin']],
                               [(W, jnp.float32)], max_tile=NARROW_ROW_TILE)
            bond_l = bond_embed(cp['bond_tables'])
            xd = xpre[dst_g]                         # (E_pad, W) gather of target rows
            xs = xpre[src_g]                         # (E_pad, W) gather of source rows
            msg = run_rowwise(
                conv_edge_kernel, [xd, xs, bond_l],
                [cp['gm2'], cp['gs2'], cp['wgv'], cp['wpost'], cp['bpost']],
                [(W, jnp.float32)], max_tile=NARROW_ROW_TILE)
            aggr = edge_scatter(msg)                 # scatter-add to destination nodes
            x_raw = aggr
            x_out = run_fma(cp['scale_deg'][deg_idx], aggr, x_out)
        conv_out = x_out

        # --- VirtMessage ---------------------------------------------------
        h_virt = graph_scatter(h_in) + h_virt
        g = lp['virt']
        y_virt = run_rowwise(
            glb_kernel, [h_virt],
            [g['wpre'], g['bpre'], g['gm2'], g['gs2'], g['wgv'], g['wpost'], g['bpost']],
            [(W, jnp.float32)], max_tile=NARROW_ROW_TILE)
        virt_g = y_virt[batch_p]                     # gather back to nodes

        # --- AttMessage (q/k/kv production) ---------------------------------
        ap = lp['att']
        qk, kv = run_rowwise(
            att_qkv_kernel, [h_in],
            [ap['wpre'], ap['bpre'], ap['gm2'], ap['gs2'], ap['wqkv'], ap['eh'], ap['ev']],
            [(2 * (2 * W), jnp.float32), (NHV, jnp.bfloat16)], max_tile=WIDE_ROW_TILE)
        q = qk[:, :2 * W]
        k = qk[:, 2 * W:]
        h_att = graph_scatter(kv.astype(jnp.float32)) + h_att   # f32 scatter-accumulate
        kg = graph_scatter(k)[batch_p]               # (N_pad, 2W)
        s_node = h_att[batch_p].astype(jnp.bfloat16)  # (N_pad, NHV) bf16 dominant stream

        # --- fused attention-out + residual sum + main GatedLinearBlock ----
        mp = lp['main']
        h_in = run_rowwise(
            layer_out_kernel,
            [h_in, conv_out, virt_g, q, kg, s_node],
            [ap['hblk'], ap['eh'], ap['ered'], ap['wpost'], ap['bpost'],
             mp['wpre'], mp['bpre'], mp['gm2'], mp['gs2'], mp['wgv'],
             mp['wpost'], mp['bpost']],
            [(W, jnp.float32)], max_tile=WIDE_ROW_TILE)

    return h_in[:N]


# ---------------------------------------------------------------------------
if __name__ == "__main__":
    key = jax.random.PRNGKey(0)
    k_atom, k_bond, k_param = jax.random.split(key, 3)

    num_layers, conv_hop, conv_kernel = 2, 1, 2
    num_graphs = 2

    # graph 0: nodes 0..5 ring; graph 1: nodes 6..9 ring (bidirectional edges)
    src_list, dst_list = [], []

    def add_ring(nodes):
        n = len(nodes)
        for i in range(n):
            u, v = nodes[i], nodes[(i + 1) % n]
            src_list.extend([u, v])
            dst_list.extend([v, u])

    add_ring(list(range(0, 6)))
    add_ring(list(range(6, 10)))

    N = 10
    E = len(src_list)
    edge_index = jnp.array([src_list, dst_list], jnp.int32)
    batch = jnp.array([0] * 6 + [1] * 4, jnp.int32)

    x_atom = jnp.stack(
        [jax.random.randint(jax.random.fold_in(k_atom, f), (N,), 0, ATOM_DIMS[f])
         for f in range(len(ATOM_DIMS))], axis=1).astype(jnp.int32)
    edge_attr = jnp.stack(
        [jax.random.randint(jax.random.fold_in(k_bond, f), (E,), 0, BOND_DIMS[f])
         for f in range(len(BOND_DIMS))], axis=1).astype(jnp.int32)

    params = init_params(k_param, num_layers, conv_hop, conv_kernel)

    out = encoder_forward(params, x_atom, edge_index, edge_attr, batch, num_graphs,
                          num_layers, conv_hop, conv_kernel)
    out = jax.block_until_ready(out)

    assert out.shape == (N, EMB_DIM), out.shape
    assert bool(jnp.all(jnp.isfinite(out)))
    print("KERNEL_OK")
</pallas_src>

<mosaic_0001>
module attributes {stable_mosaic.version = 11 : i64} {
  func.func @fma_kernel(%arg0: i32, %arg1: memref<8x128xf32, #tpu.memory_space<vmem>>, %arg2: memref<8x128xf32, #tpu.memory_space<vmem>>, %arg3: memref<8x128xf32, #tpu.memory_space<vmem>>, %arg4: memref<8x128xf32, #tpu.memory_space<vmem>>) attributes {dimension_semantics = [#tpu.dimension_semantics<parallel>], iteration_bounds = array<i64: 1>, scalar_prefetch = 0 : i64, scratch_operands = 0 : i64, tpu.core_type = #tpu.core_type<tc>, window_params = [{transform_indices = @transform_0, window_bounds = array<i64: 8, 128>}, {transform_indices = @transform_1, window_bounds = array<i64: 8, 128>}, {transform_indices = @transform_2, window_bounds = array<i64: 8, 128>}, {transform_indices = @transform_3, window_bounds = array<i64: 8, 128>}]} {
    %c0 = arith.constant 0 : index
    %c0_0 = arith.constant 0 : index
    %0 = vector.load %arg1[%c0, %c0_0] : memref<8x128xf32, #tpu.memory_space<vmem>>, vector<8x128xf32>
    %c0_1 = arith.constant 0 : index
    %c0_2 = arith.constant 0 : index
    %1 = vector.load %arg2[%c0_1, %c0_2] : memref<8x128xf32, #tpu.memory_space<vmem>>, vector<8x128xf32>
    %2 = arith.mulf %0, %1 : vector<8x128xf32>
    %c0_3 = arith.constant 0 : index
    %c0_4 = arith.constant 0 : index
    %3 = vector.load %arg3[%c0_3, %c0_4] : memref<8x128xf32, #tpu.memory_space<vmem>>, vector<8x128xf32>
    %4 = arith.addf %2, %3 : vector<8x128xf32>
    %c0_5 = arith.constant 0 : index
    %c0_6 = arith.constant 0 : index
    %5 = vector.load %arg4[%c0_5, %c0_6] : memref<8x128xf32, #tpu.memory_space<vmem>>, vector<8x128xf32>
    tpu.vector_store %arg4[%c0_5, %c0_6], %4 {strides = array<i32>} : memref<8x128xf32, #tpu.memory_space<vmem>>, vector<8x128xf32>,
    return
  }
  func.func @transform_0(%arg0: i32) -> (i32, i32) {
    %c0_i32 = arith.constant 0 : i32
    %c0_i32_0 = arith.constant 0 : i32
    return %arg0, %c0_i32 : i32, i32
  }
  func.func @transform_1(%arg0: i32) -> (i32, i32) {
    %c0_i32 = arith.constant 0 : i32
    %c0_i32_0 = arith.constant 0 : i32
    return %arg0, %c0_i32 : i32, i32
  }
  func.func @transform_2(%arg0: i32) -> (i32, i32) {
    %c0_i32 = arith.constant 0 : i32
    %c0_i32_0 = arith.constant 0 : i32
    return %arg0, %c0_i32 : i32, i32
  }
  func.func @transform_3(%arg0: i32) -> (i32, i32) {
    %c0_i32 = arith.constant 0 : i32
    %c0_i32_0 = arith.constant 0 : i32
    return %arg0, %c0_i32 : i32, i32
  }
}

</mosaic_0001>

<llo_original>
// kernel: tpu_custom_call.1
$region0: #{tpu_custom_call.1}
  #allocation0 [shape = 'u32[]', space=smem, size = 0x4, offset = 0x4, fixed_abs, tag = 'smem constant byte address 0x4 - core index']
  #allocation1 [shape = 'u32[144,128]{1,0:T(1,128)}', space=vmem, size = 0x12000, scoped, tag = 'internal scratch']
  %s0 = inlined_call_operand.hbm [shape: f32[8,128], index: 0, kind: input, shape index: {}]
  %s1 = inlined_call_operand.hbm [shape: f32[8,128], index: 1, kind: input, shape index: {}]
  %s2 = inlined_call_operand.hbm [shape: f32[8,128], index: 2, kind: input, shape index: {}]
  %s3 = inlined_call_operand.hbm [shape: f32[8,128], index: 3, kind: output, shape index: {}]
  %s4 = sld [smem:[#allocation0]]
  $region34: #{tpu_custom_call.1} parent=0
    _
  %s6 = ssub.s32 1, %s4
  %s7 = scalar_select 0, %s6, %s4
  $region1: #{tpu_custom_call.1} parent=0
    #allocation2 [shape = 'u8[4096]{0}', space=vmem, size = 0x1000, scoped, tag = 'input window, operand 0, single buffered']
    #allocation3 [shape = 's32[1]{0}', space=sflag, size = 0x4, scoped, tag = 'scoped memory for tpu_custom_call.1']
    #allocation4 [shape = 's32[1]{0}', space=sflag, size = 0x4, scoped, tag = 'scoped memory for tpu_custom_call.1']
    #allocation5 [shape = 'u8[4096]{0}', space=vmem, size = 0x1000, scoped, tag = 'input window, operand 1, single buffered']
    #allocation6 [shape = 's32[1]{0}', space=sflag, size = 0x4, scoped, tag = 'scoped memory for tpu_custom_call.1']
    #allocation7 [shape = 'u8[4096]{0}', space=vmem, size = 0x1000, scoped, tag = 'input window, operand 2, single buffered']
    #allocation8 [shape = 'u8[4096]{0}', space=vmem, size = 0x1000, scoped, tag = 'output window, operand 0, single buffered']
    %8 = vsyncpa [#allocation3], 0
    %9 = vsyncpa [#allocation6], 0
    %10 = vsyncpa [#allocation4], 0
    // Predicated region
    $region2: #{tpu_custom_call.1} parent=1 // pred_check
      _
    $region3: #{tpu_custom_call.1} parent=1 // pred_check_branch
      %12 = sbr.rel (0) target = $region5
    $region4: #{tpu_custom_call.1} parent=1 // pred_region
      %s14 = ssub.s32 128, 128
      %15 = vsyncadd [#allocation3], %s14
      %s17 = sshll.u32 [#allocation2], 4
      %s18 = int_to_ptr.vmem [resolvable:$true] %s17
      %20 = dma.hbm_to_vmem [thread:$0]  %s0, 128, %s18, [#allocation3]
    $region5: #{tpu_custom_call.1} parent=1 // pred_fallthru
      _
    // Predicated region
    $region6: #{tpu_custom_call.1} parent=1 // pred_check
      _
    $region7: #{tpu_custom_call.1} parent=1 // pred_check_branch
      %22 = sbr.rel (0) target = $region9
    $region8: #{tpu_custom_call.1} parent=1 // pred_region
      %s24 = ssub.s32 128, 128
      %25 = vsyncadd [#allocation6], %s24
      %s27 = sshll.u32 [#allocation5], 4
      %s28 = int_to_ptr.vmem [resolvable:$true] %s27
      %30 = dma.hbm_to_vmem [thread:$0]  %s1, 128, %s28, [#allocation6]
    $region9: #{tpu_custom_call.1} parent=1 // pred_fallthru
      _
    // Predicated region
    $region10: #{tpu_custom_call.1} parent=1 // pred_check
      _
    $region11: #{tpu_custom_call.1} parent=1 // pred_check_branch
      %32 = sbr.rel (0) target = $region13
    $region12: #{tpu_custom_call.1} parent=1 // pred_region
      %s34 = ssub.s32 128, 128
      %35 = vsyncadd [#allocation6], %s34
      %s37 = sshll.u32 [#allocation7], 4
      %s38 = int_to_ptr.vmem [resolvable:$true] %s37
      %40 = dma.hbm_to_vmem [thread:$0]  %s2, 128, %s38, [#allocation6]
    $region13: #{tpu_custom_call.1} parent=1 // pred_fallthru
      _
    // Predicated region
    $region14: #{tpu_custom_call.1} parent=1 // pred_check
      _
    $region15: #{tpu_custom_call.1} parent=1 // pred_check_branch
      %42 = sbr.rel (0) target = $region17
    $region16: #{tpu_custom_call.1} parent=1 // pred_region
      %43 = dma.done [#allocation3], 128
    $region17: #{tpu_custom_call.1} parent=1 // pred_fallthru
      _
    // Predicated region
    $region18: #{tpu_custom_call.1} parent=1 // pred_check
      _
    $region19: #{tpu_custom_call.1} parent=1 // pred_check_branch
      %45 = sbr.rel (0) target = $region21
    $region20: #{tpu_custom_call.1} parent=1 // pred_region
      %46 = dma.done [#allocation6], 128
    $region21: #{tpu_custom_call.1} parent=1 // pred_fallthru
      _
    // Predicated region
    $region22: #{tpu_custom_call.1} parent=1 // pred_check
      _
    $region23: #{tpu_custom_call.1} parent=1 // pred_check_branch
      %48 = sbr.rel (0) target = $region25
    $region24: #{tpu_custom_call.1} parent=1 // pred_region
      %49 = dma.done [#allocation6], 128
    $region25: #{tpu_custom_call.1} parent=1 // pred_fallthru
      _
    %v50 = vld [vmem:[#allocation2] sm:$0xff]
    %v51 = vld [vmem:[#allocation5] sm:$0xff]
    %v52 = vmul.f32 %v50, %v51
    %v53 = vld [vmem:[#allocation7] sm:$0xff]
    %v54 = vadd.f32 %v52, %v53
    %55 = vst [vmem:[#allocation8] sm:$0xff] %v54
    // Predicated region
    $region26: #{tpu_custom_call.1} parent=1 // pred_check
      _
    $region27: #{tpu_custom_call.1} parent=1 // pred_check_branch
      %57 = sbr.rel (0) target = $region29
    $region28: #{tpu_custom_call.1} parent=1 // pred_region
      %s59 = ssub.s32 128, 128
      %60 = vsyncadd [#allocation4], %s59
      %s62 = sshll.u32 [#allocation8], 4
      %s63 = int_to_ptr.vmem [resolvable:$true] %s62
      %65 = dma.vmem_to_hbm [thread:$0]  %s63, 128, %s3, [#allocation4]
    $region29: #{tpu_custom_call.1} parent=1 // pred_fallthru
      _
    // Predicated region
    $region30: #{tpu_custom_call.1} parent=1 // pred_check
      _
    $region31: #{tpu_custom_call.1} parent=1 // pred_check_branch
      %67 = sbr.rel (0) target = $region33
    $region32: #{tpu_custom_call.1} parent=1 // pred_region
      %68 = dma.done [#allocation4], 128
    $region33: #{tpu_custom_call.1} parent=1 // pred_fallthru
      _
    %69 = vsyncpa [#allocation3], 1
    %70 = vsyncpa [#allocation6], 1
    %71 = vsyncpa [#allocation4], 1

</llo_original>
